<compile_context>
chip_gen: v7x
topology: tpu7x:2x2x1
jax: 0.10.0
libtpu: 0.0.40
codegen_flags: <defaults>
</compile_context>

<pallas_src>
import functools

import jax
import jax.numpy as jnp
from jax.experimental import pallas as pl
from jax.experimental.pallas import tpu as pltpu


def _round_up(x: int, m: int) -> int:
    return (x + m - 1) // m * m


def _contrastive_loss_kernel(margin, inv_nsq,
                             x_i_ref, x_j_ref, meta_i_ref, meta_j_ref,
                             out_ref, acc_ref):
    i = pl.program_id(0)
    j = pl.program_id(1)

    @pl.when(jnp.logical_and(i == 0, j == 0))
    def _init():
        acc_ref[...] = jnp.zeros_like(acc_ref)

    x_i = x_i_ref[...]                       # (TI, D)
    x_j = x_j_ref[...]                       # (TJ, D)

    # Gram tile on the MXU: (TI, D) x (TJ, D)^T -> (TI, TJ), f32 accumulation.
    gram = jax.lax.dot_general(
        x_i, x_j,
        dimension_numbers=(((1,), (1,)), ((), ())),
        preferred_element_type=jnp.float32)

    meta_i = meta_i_ref[...]                 # (TI, 3): cols = [sq, label, valid]
    meta_j = meta_j_ref[...]                 # (3, TJ): rows = [sq, label, valid]
    sq_i, lbl_i, val_i = meta_i[:, 0:1], meta_i[:, 1:2], meta_i[:, 2:3]   # (TI, 1)
    sq_j, lbl_j, val_j = meta_j[0:1, :], meta_j[1:2, :], meta_j[2:3, :]   # (1, TJ)

    # ||x_i - x_j||^2, clamped (Gram cancellation can go slightly negative).
    dist = jnp.maximum(sq_i + sq_j - 2.0 * gram, 0.0)       # (TI, TJ)

    eq = (lbl_i == lbl_j).astype(jnp.float32)               # label_equal mask
    vmask = val_i * val_j                                    # 0 for padded pairs

    pos = dist * eq                                          # distances * label_equal
    neg = jnp.maximum(margin - (dist - pos), 0.0)            # relu(margin - dist*~eq)
    acc_ref[...] += (pos + neg) * vmask

    @pl.when(jnp.logical_and(i == pl.num_programs(0) - 1,
                             j == pl.num_programs(1) - 1))
    def _finalize():
        out_ref[0, 0] = jnp.sum(acc_ref[...]) * inv_nsq


def contrastive_loss(outputs, targets, margin: float = 2.0, tile: int = 256):
    """Pallas-TPU equivalent of ContrastiveLoss(margin).forward(outputs, targets)."""
    n, d = outputs.shape
    margin = float(margin)

    # Tile / padding geometry.  256 keeps the 2x256^2 MXU full on v6e/v7x and
    # fits comfortably in VMEM with double-buffering on v5e/v6e/v7x alike.
    if n <= tile:
        tile = max(_round_up(n, 8), 8)
    n_pad = _round_up(n, tile)
    d_pad = _round_up(d, 128)

    x = outputs.astype(jnp.float32)
    x = jnp.pad(x, ((0, n_pad - n), (0, d_pad - d)))

    # Precomputed side tables: squared norms, labels (as exact f32), validity.
    sq = jnp.sum(x * x, axis=1)                                   # (n_pad,)
    lbl = jnp.pad(targets.astype(jnp.float32), (0, n_pad - n),
                  constant_values=-1.0)
    valid = (jnp.arange(n_pad) < n).astype(jnp.float32)
    meta_row = jnp.stack([sq, lbl, valid], axis=0)                # (3, n_pad)
    meta_col = meta_row.T                                         # (n_pad, 3)

    n_tiles = n_pad // tile
    kernel = functools.partial(_contrastive_loss_kernel, margin, 1.0 / (n * n))

    out = pl.pallas_call(
        kernel,
        out_shape=jax.ShapeDtypeStruct((1, 1), jnp.float32),
        grid=(n_tiles, n_tiles),
        in_specs=[
            pl.BlockSpec((tile, d_pad), lambda i, j: (i, 0)),     # x rows, i side
            pl.BlockSpec((tile, d_pad), lambda i, j: (j, 0)),     # x rows, j side
            pl.BlockSpec((tile, 3), lambda i, j: (i, 0)),         # [sq,lbl,valid] col view
            pl.BlockSpec((3, tile), lambda i, j: (0, j)),         # [sq,lbl,valid] row view
        ],
        out_specs=pl.BlockSpec(memory_space=pltpu.MemorySpace.SMEM),
        scratch_shapes=[pltpu.VMEM((tile, tile), jnp.float32)],
        compiler_params=pltpu.CompilerParams(
            dimension_semantics=("arbitrary", "arbitrary")),
    )(x, x, meta_col, meta_row)
    return out[0, 0]


def _reference_loss(outputs, targets, margin: float = 2.0):
    diff = outputs[:, None, :] - outputs[None, :, :]
    dist = jnp.sum(diff * diff, axis=2)
    eq = targets[:, None] == targets[None, :]
    pos = dist * eq
    neg = dist * (~eq)
    return pos.mean() + jnp.maximum(margin - neg, 0.0).mean()


if __name__ == "__main__":
    key = jax.random.PRNGKey(0)
    k1, k2 = jax.random.split(key)

    N, D = 8, 32  # batch of 8 embeddings, feature dim 32
    outputs = jax.random.normal(k1, (N, D), dtype=jnp.float32)
    targets = jax.random.randint(k2, (N,), 0, 3, dtype=jnp.int32)

    loss = contrastive_loss(outputs, targets, margin=2.0)
    loss = jax.block_until_ready(loss)

    ref = _reference_loss(outputs, targets, margin=2.0)
    assert jnp.allclose(loss, ref, rtol=1e-4, atol=1e-4), (loss, ref)

    print("KERNEL_OK")
</pallas_src>

<mosaic_0001>
module attributes {stable_mosaic.version = 11 : i64} {
  func.func @_contrastive_loss_kernel(%arg0: i32, %arg1: i32, %arg2: memref<8x128xf32, #tpu.memory_space<vmem>>, %arg3: memref<8x128xf32, #tpu.memory_space<vmem>>, %arg4: memref<8x3xf32, #tpu.memory_space<vmem>>, %arg5: memref<3x8xf32, #tpu.memory_space<vmem>>, %arg6: memref<1x1xf32, #tpu.memory_space<smem>>, %arg7: memref<8x8xf32, #tpu.memory_space<vmem>>) attributes {dimension_semantics = [#tpu.dimension_semantics<arbitrary>, #tpu.dimension_semantics<arbitrary>], iteration_bounds = array<i64: 1, 1>, scalar_prefetch = 0 : i64, scratch_operands = 1 : i64, tpu.core_type = #tpu.core_type<tc>, window_params = [{transform_indices = @transform_0, window_bounds = array<i64: 8, 128>}, {transform_indices = @transform_1, window_bounds = array<i64: 8, 128>}, {transform_indices = @transform_2, window_bounds = array<i64: 8, 3>}, {transform_indices = @transform_3, window_bounds = array<i64: 3, 8>}, {transform_indices = @transform_4, window_bounds = array<i64: 1, 1>}]} {
    %c0_i32 = arith.constant 0 : i32
    %0 = arith.cmpi eq, %arg0, %c0_i32 : i32
    %c0_i32_0 = arith.constant 0 : i32
    %1 = arith.cmpi eq, %arg1, %c0_i32_0 : i32
    %2 = arith.andi %0, %1 : i1
    %3 = arith.extui %2 : i1 to i32
    %c0_i32_1 = arith.constant 0 : i32
    %4 = arith.cmpi ne, %3, %c0_i32_1 : i32
    scf.if %4 {
      %cst_20 = arith.constant 0.000000e+00 : f32
      %48 = vector.broadcast %cst_20 : f32 to vector<8x8xf32>
      %c0_21 = arith.constant 0 : index
      %c0_22 = arith.constant 0 : index
      %49 = vector.load %arg7[%c0_21, %c0_22] : memref<8x8xf32, #tpu.memory_space<vmem>>, vector<8x8xf32>
      tpu.vector_store %arg7[%c0_21, %c0_22], %48 {strides = array<i32>} : memref<8x8xf32, #tpu.memory_space<vmem>>, vector<8x8xf32>,
    } else {
    }
    %c0 = arith.constant 0 : index
    %c0_2 = arith.constant 0 : index
    %5 = vector.load %arg2[%c0, %c0_2] : memref<8x128xf32, #tpu.memory_space<vmem>>, vector<8x128xf32>
    %c0_3 = arith.constant 0 : index
    %c0_4 = arith.constant 0 : index
    %6 = vector.load %arg3[%c0_3, %c0_4] : memref<8x128xf32, #tpu.memory_space<vmem>>, vector<8x128xf32>
    %cst = arith.constant dense<0.000000e+00> : vector<8x8xf32>
    %7 = tpu.matmul %5, %6, %cst {dimension_numbers = #tpu.dot_dimension_numbers<[1], [1], [0], [0], [0, 0, 1, 0], [], []>} : vector<8x128xf32>, vector<8x128xf32>, vector<8x8xf32> -> vector<8x8xf32>
    %c0_5 = arith.constant 0 : index
    %c0_6 = arith.constant 0 : index
    %8 = vector.load %arg4[%c0_5, %c0_6] : memref<8x3xf32, #tpu.memory_space<vmem>>, vector<8x3xf32>
    %c0_7 = arith.constant 0 : index
    %c0_8 = arith.constant 0 : index
    %9 = vector.load %arg5[%c0_7, %c0_8] : memref<3x8xf32, #tpu.memory_space<vmem>>, vector<3x8xf32>
    %10 = vector.extract_strided_slice %8 {offsets = [0, 0], sizes = [8, 1], strides = [1, 1]} : vector<8x3xf32> to vector<8x1xf32>
    %11 = vector.extract_strided_slice %8 {offsets = [0, 1], sizes = [8, 1], strides = [1, 1]} : vector<8x3xf32> to vector<8x1xf32>
    %12 = vector.extract_strided_slice %8 {offsets = [0, 2], sizes = [8, 1], strides = [1, 1]} : vector<8x3xf32> to vector<8x1xf32>
    %13 = vector.extract_strided_slice %9 {offsets = [0, 0], sizes = [1, 8], strides = [1, 1]} : vector<3x8xf32> to vector<1x8xf32>
    %14 = vector.extract_strided_slice %9 {offsets = [1, 0], sizes = [1, 8], strides = [1, 1]} : vector<3x8xf32> to vector<1x8xf32>
    %15 = vector.extract_strided_slice %9 {offsets = [2, 0], sizes = [1, 8], strides = [1, 1]} : vector<3x8xf32> to vector<1x8xf32>
    %16 = vector.broadcast %10 : vector<8x1xf32> to vector<8x8xf32>
    %17 = vector.broadcast %13 : vector<1x8xf32> to vector<8x8xf32>
    %18 = arith.addf %16, %17 : vector<8x8xf32>
    %cst_9 = arith.constant 2.000000e+00 : f32
    %19 = vector.broadcast %cst_9 : f32 to vector<8x8xf32>
    %20 = arith.mulf %19, %7 : vector<8x8xf32>
    %21 = arith.subf %18, %20 : vector<8x8xf32>
    %cst_10 = arith.constant 0.000000e+00 : f32
    %22 = vector.broadcast %cst_10 : f32 to vector<8x8xf32>
    %23 = arith.maximumf %21, %22 : vector<8x8xf32>
    %24 = vector.broadcast %11 : vector<8x1xf32> to vector<8x8xf32>
    %25 = vector.broadcast %14 : vector<1x8xf32> to vector<8x8xf32>
    %26 = arith.cmpf oeq, %24, %25 : vector<8x8xf32>
    %27 = arith.extui %26 : vector<8x8xi1> to vector<8x8xi32>
    %28 = arith.sitofp %27 : vector<8x8xi32> to vector<8x8xf32>
    %29 = vector.broadcast %12 : vector<8x1xf32> to vector<8x8xf32>
    %30 = vector.broadcast %15 : vector<1x8xf32> to vector<8x8xf32>
    %31 = arith.mulf %29, %30 : vector<8x8xf32>
    %32 = arith.mulf %23, %28 : vector<8x8xf32>
    %33 = arith.subf %23, %32 : vector<8x8xf32>
    %cst_11 = arith.constant 2.000000e+00 : f32
    %34 = vector.broadcast %cst_11 : f32 to vector<8x8xf32>
    %35 = arith.subf %34, %33 : vector<8x8xf32>
    %cst_12 = arith.constant 0.000000e+00 : f32
    %36 = vector.broadcast %cst_12 : f32 to vector<8x8xf32>
    %37 = arith.maximumf %35, %36 : vector<8x8xf32>
    %c0_13 = arith.constant 0 : index
    %c0_14 = arith.constant 0 : index
    %38 = vector.load %arg7[%c0_13, %c0_14] : memref<8x8xf32, #tpu.memory_space<vmem>>, vector<8x8xf32>
    %39 = arith.addf %32, %37 : vector<8x8xf32>
    %40 = arith.mulf %39, %31 : vector<8x8xf32>
    %41 = arith.addf %38, %40 : vector<8x8xf32>
    %c0_15 = arith.constant 0 : index
    %c0_16 = arith.constant 0 : index
    %42 = vector.load %arg7[%c0_15, %c0_16] : memref<8x8xf32, #tpu.memory_space<vmem>>, vector<8x8xf32>
    tpu.vector_store %arg7[%c0_15, %c0_16], %41 {strides = array<i32>} : memref<8x8xf32, #tpu.memory_space<vmem>>, vector<8x8xf32>,
    %c0_i32_17 = arith.constant 0 : i32
    %43 = arith.cmpi eq, %arg0, %c0_i32_17 : i32
    %c0_i32_18 = arith.constant 0 : i32
    %44 = arith.cmpi eq, %arg1, %c0_i32_18 : i32
    %45 = arith.andi %43, %44 : i1
    %46 = arith.extui %45 : i1 to i32
    %c0_i32_19 = arith.constant 0 : i32
    %47 = arith.cmpi ne, %46, %c0_i32_19 : i32
    scf.if %47 {
      %c0_20 = arith.constant 0 : index
      %c0_21 = arith.constant 0 : index
      %48 = vector.load %arg7[%c0_20, %c0_21] : memref<8x8xf32, #tpu.memory_space<vmem>>, vector<8x8xf32>
      %49 = vector.shape_cast %48 : vector<8x8xf32> to vector<1x8x8xf32>
      %cst_22 = arith.constant dense<0.000000e+00> : vector<1xf32>
      %50 = vector.multi_reduction <add>, %49, %cst_22 [1, 2] : vector<1x8x8xf32> to vector<1xf32>
      %51 = vector.shape_cast %50 : vector<1xf32> to vector<1x1x1xf32>
      %52 = vector.extract %51[0, 0, 0] : f32 from vector<1x1x1xf32>
      %cst_23 = arith.constant 1.562500e-02 : f32
      %53 = arith.mulf %52, %cst_23 : f32
      %c0_24 = arith.constant 0 : index
      %c0_25 = arith.constant 0 : index
      %54 = memref.load %arg6[%c0_24, %c0_25] : memref<1x1xf32, #tpu.memory_space<smem>>
      memref.store %53, %arg6[%c0_24, %c0_25] : memref<1x1xf32, #tpu.memory_space<smem>>
    } else {
    }
    return
  }
  func.func @transform_0(%arg0: i32, %arg1: i32) -> (i32, i32) {
    %c0_i32 = arith.constant 0 : i32
    %c0_i32_0 = arith.constant 0 : i32
    return %arg0, %c0_i32 : i32, i32
  }
  func.func @transform_1(%arg0: i32, %arg1: i32) -> (i32, i32) {
    %c0_i32 = arith.constant 0 : i32
    %c0_i32_0 = arith.constant 0 : i32
    return %arg1, %c0_i32 : i32, i32
  }
  func.func @transform_2(%arg0: i32, %arg1: i32) -> (i32, i32) {
    %c0_i32 = arith.constant 0 : i32
    %c0_i32_0 = arith.constant 0 : i32
    return %arg0, %c0_i32 : i32, i32
  }
  func.func @transform_3(%arg0: i32, %arg1: i32) -> (i32, i32) {
    %c0_i32 = arith.constant 0 : i32
    %c0_i32_0 = arith.constant 0 : i32
    return %c0_i32, %arg1 : i32, i32
  }
  func.func @transform_4(%arg0: i32, %arg1: i32) -> (i32, i32) {
    %c0_i32 = arith.constant 0 : i32
    %c0_i32_0 = arith.constant 0 : i32
    %c0_i32_1 = arith.constant 0 : i32
    return %c0_i32, %c0_i32_0 : i32, i32
  }
}

</mosaic_0001>

<llo_original>
// kernel: tpu_custom_call.1
$region0: #{tpu_custom_call.1}
  #allocation0 [shape = 'u32[]', space=smem, size = 0x4, offset = 0x4, fixed_abs, tag = 'smem constant byte address 0x4 - core index']
  #allocation1 [shape = 'u32[144,128]{1,0:T(1,128)}', space=vmem, size = 0x12000, scoped, tag = 'internal scratch']
  #allocation2 [shape = 'f32[8,8]{1,0:T(8,128)}', space=vmem, size = 0x1000, scoped, tag = 'scratch operand']
  %s0 = inlined_call_operand.vmem [shape: f32[8,128], index: 0, kind: input, shape index: {}]
  %s1 = inlined_call_operand.hbm [shape: f32[8,128], index: 1, kind: input, shape index: {}]
  %s2 = inlined_call_operand.vmem [shape: f32[8,3], index: 2, kind: input, shape index: {}]
  %s3 = inlined_call_operand.vmem [shape: f32[3,8], index: 3, kind: input, shape index: {}]
  %s4 = inlined_call_operand.hbm [shape: f32[1,1], index: 4, kind: output, shape index: {}]
  %s5 = sld [smem:[#allocation0]]
  $region38: #{tpu_custom_call.1} parent=0
    _
  %s7 = ssub.s32 1, %s5
  %s8 = scalar_select 0, %s7, %s5
  $region1: #{tpu_custom_call.1} parent=0
    #allocation3 [shape = 'u8[4096]{0}', space=vmem, size = 0x1000, scoped, tag = 'input window, operand 1, single buffered']
    #allocation4 [shape = 's32[1]{0}', space=sflag, size = 0x4, scoped, tag = 'scoped memory for tpu_custom_call.1']
    #allocation5 [shape = 's32[1]{0}', space=sflag, size = 0x4, scoped, tag = 'scoped memory for tpu_custom_call.1']
    #allocation6 [shape = 'u8[512]{0}', space=smem, size = 0x200, scoped, tag = 'output window, operand 0, single buffered']
    %9 = vsyncpa [#allocation4], 0
    %10 = vsyncpa [#allocation5], 0
    // Predicated region
    $region2: #{tpu_custom_call.1} parent=1 // pred_check
      _
    $region3: #{tpu_custom_call.1} parent=1 // pred_check_branch
      %12 = sbr.rel (0) target = $region5
    $region4: #{tpu_custom_call.1} parent=1 // pred_region
      _
    $region5: #{tpu_custom_call.1} parent=1 // pred_fallthru
      _
    // Predicated region
    $region6: #{tpu_custom_call.1} parent=1 // pred_check
      _
    $region7: #{tpu_custom_call.1} parent=1 // pred_check_branch
      %14 = sbr.rel (0) target = $region9
    $region8: #{tpu_custom_call.1} parent=1 // pred_region
      %s16 = ssub.s32 128, 128
      %17 = vsyncadd [#allocation4], %s16
      %s19 = sshll.u32 [#allocation3], 4
      %s20 = int_to_ptr.vmem [resolvable:$true] %s19
      %22 = dma.hbm_to_vmem [thread:$0]  %s1, 128, %s20, [#allocation4]
    $region9: #{tpu_custom_call.1} parent=1 // pred_fallthru
      _
    // Predicated region
    $region10: #{tpu_custom_call.1} parent=1 // pred_check
      _
    $region11: #{tpu_custom_call.1} parent=1 // pred_check_branch
      %24 = sbr.rel (0) target = $region13
    $region12: #{tpu_custom_call.1} parent=1 // pred_region
      _
    $region13: #{tpu_custom_call.1} parent=1 // pred_fallthru
      _
    // Predicated region
    $region14: #{tpu_custom_call.1} parent=1 // pred_check
      _
    $region15: #{tpu_custom_call.1} parent=1 // pred_check_branch
      %26 = sbr.rel (0) target = $region17
    $region16: #{tpu_custom_call.1} parent=1 // pred_region
      _
    $region17: #{tpu_custom_call.1} parent=1 // pred_fallthru
      _
    // Predicated region
    $region18: #{tpu_custom_call.1} parent=1 // pred_check
      _
    $region19: #{tpu_custom_call.1} parent=1 // pred_check_branch
      %28 = sbr.rel (0) target = $region21
    $region20: #{tpu_custom_call.1} parent=1 // pred_region
      %29 = dma.done [#allocation4], 128
    $region21: #{tpu_custom_call.1} parent=1 // pred_fallthru
      _
    %p30 = scmp.eq.s32.totalorder 0, 0
    %p31 = scmp.eq.s32.totalorder 0, 0
    %p32 = pnand %p30, %p31
    %p33 = pneg %p32
    // Predicated region
    $region22: #{tpu_custom_call.1} parent=1 // pred_check
      _
    $region23: #{tpu_custom_call.1} parent=1 // pred_check_branch
      %35 = sbr.rel (%p32) target = $region25
    $region24: #{tpu_custom_call.1} parent=1 // pred_region
      %vm36 = vcmask 64512
      %37 = vst.msk [vmem:[#allocation2] sm:$0xff] %vm36, 0.0
    $region25: #{tpu_custom_call.1} parent=1 // pred_fallthru
      _
    %v38 = vld [vmem:[%s0] sm:$0xff]
    %v39 = vld [vmem:[#allocation3] sm:$0xff]
    %40 = vmatprep.subr.mxu0 0.0
    %41 = vmatpush1.xpose.msra.mxu0 %v39
    %42 = vmatprep.subr.mxu0 0.0
    %43 = vmatpush1.xpose.msra.mxu0 0.0
    %44 = vmatprep.subr.mxu0 0.0
    %45 = vmatpush1.xpose.msra.mxu0 0.0
    %46 = vmatprep.subr.mxu0 0.0
    %47 = vmatpush1.xpose.msra.mxu0 0.0
    %48 = vmatprep.subr.mxu0 0.0
    %49 = vmatpush1.xpose.msra.mxu0 0.0
    %50 = vmatprep.subr.mxu0 0.0
    %51 = vmatpush1.xpose.msra.mxu0 0.0
    %52 = vmatprep.subr.mxu0 0.0
    %53 = vmatpush1.xpose.msra.mxu0 0.0
    %54 = vmatprep.subr.mxu0 0.0
    %55 = vmatpush1.xpose.msra.mxu0 0.0
    %56 = vmatprep.subr.mxu0 0.0
    %57 = vmatpush1.xpose.msra.mxu0 0.0
    %58 = vmatprep.subr.mxu0 0.0
    %59 = vmatpush1.xpose.msra.mxu0 0.0
    %60 = vmatprep.subr.mxu0 0.0
    %61 = vmatpush1.xpose.msra.mxu0 0.0
    %62 = vmatprep.subr.mxu0 0.0
    %63 = vmatpush1.xpose.msra.mxu0 0.0
    %64 = vmatprep.subr.mxu0 0.0
    %65 = vmatpush1.xpose.msra.mxu0 0.0
    %66 = vmatprep.subr.mxu0 0.0
    %67 = vmatpush1.xpose.msra.mxu0 0.0
    %68 = vmatprep.subr.mxu0 0.0
    %69 = vmatpush1.xpose.msra.mxu0 0.0
    %70 = vmatprep.subr.mxu0 0.0
    %71 = vmatpush1.xpose.msra.mxu0 0.0
    %72 = vmatprep.subr.mxu0 0.0
    %73 = vmatpush1.xpose.msra.mxu0 0.0
    %74 = vmatprep.subr.mxu0 0.0
    %75 = vmatpush1.xpose.msra.mxu0 0.0
    %76 = vmatprep.subr.mxu0 0.0
    %77 = vmatpush1.xpose.msra.mxu0 0.0
    %78 = vmatprep.subr.mxu0 0.0
    %79 = vmatpush1.xpose.msra.mxu0 0.0
    %80 = vmatprep.subr.mxu0 0.0
    %81 = vmatpush1.xpose.msra.mxu0 0.0
    %82 = vmatprep.subr.mxu0 0.0
    %83 = vmatpush1.xpose.msra.mxu0 0.0
    %84 = vmatprep.subr.mxu0 0.0
    %85 = vmatpush1.xpose.msra.mxu0 0.0
    %86 = vmatprep.subr.mxu0 0.0
    %87 = vmatpush1.xpose.msra.mxu0 0.0
    %88 = vmatprep.subr.mxu0 0.0
    %89 = vmatpush1.xpose.msra.mxu0 0.0
    %90 = vmatprep.subr.mxu0 0.0
    %91 = vmatpush1.xpose.msra.mxu0 0.0
    %92 = vmatprep.subr.mxu0 0.0
    %93 = vmatpush1.xpose.msra.mxu0 0.0
    %94 = vmatprep.subr.mxu0 0.0
    %95 = vmatpush1.xpose.msra.mxu0 0.0
    %96 = vmatprep.subr.mxu0 0.0
    %97 = vmatpush1.xpose.msra.mxu0 0.0
    %98 = vmatprep.subr.mxu0 0.0
    %99 = vmatpush1.xpose.msra.mxu0 0.0
    %100 = vmatprep.subr.mxu0 0.0
    %101 = vmatpush1.xpose.msra.mxu0 0.0
    %102 = vmatprep.subr.mxu0 0.0
    %103 = vmatpush1.xpose.msra.mxu0 0.0
    %104 = vmatprep.mubr.f32.mxu0 0.0
    %105 = vmatmul.mubr.f32.gmra.mrb[0].mxu0 %v38
    %v106 = vpop.f32.mrb[0].mxu0
    %v107 = vadd.f32 0.0, %v106
    %v108 = vpop.f32.mrb[0].mxu0
    %109 = vdwg.mxu0
    %v110 = vld [vmem:[%s2] sm:$0xff]
    %v111 = vld [vmem:[%s3] sm:$0x7]
    %113 = vset.pattern.permute.xlu0 0
    %114 = vperm.xlu0 %113, %v110
    %v115 = vpop.permute.xlu0 %114
    %v117 = vlaneseq
    %v118 = vshrl.u32 %v117, 7
    %v119 = vsub.s32 0, %v118
    %v120 = vrot.slane %v111, %v119
    %v121 = vadd.f32 %v115, %v120
    %v122 = vmul.f32 %v107, 2.0
    %v123 = vsub.f32 %v121, %v122
    %v124 = vmax.f32 %v123, 0.0
    %125 = vset.pattern.permute.xlu0 1
    %126 = vperm.xlu0 %125, %v110
    %v127 = vpop.permute.xlu0 %126
    %v129 = vlaneseq
    %v130 = vshrl.u32 %v129, 7
    %v131 = vsub.s32 1, %v130
    %v132 = vrot.slane %v111, %v131
    %vm133 = vcmp.eq.f32.partialorder %v127, %v132
    %v134 = vsel %vm133, 1, 0
    %v135 = vcvt.s32.f32 %v134
    %136 = vset.pattern.permute.xlu0 2
    %137 = vperm.xlu0 %136, %v110
    %v138 = vpop.permute.xlu0 %137
    %v140 = vlaneseq
    %v141 = vshrl.u32 %v140, 7
    %v142 = vsub.s32 2, %v141
    %v143 = vrot.slane %v111, %v142
    %v144 = vmul.f32 %v138, %v143
    %v145 = vmul.f32 %v124, %v135
    %v146 = vsub.f32 %v124, %v145
    %v147 = vsub.f32 2.0, %v146
    %v148 = vmax.f32 %v147, 0.0
    %v149 = vld [vmem:[#allocation2] sm:$0xff]
    %v150 = vadd.f32 %v145, %v148
    %v151 = vmul.f32 %v150, %v144
    %v152 = vadd.f32 %v149, %v151
    %vm153 = vcmask 64512
    %154 = vst.msk [vmem:[#allocation2] sm:$0xff] %vm153, %v152
    // Predicated region
    $region26: #{tpu_custom_call.1} parent=1 // pred_check
      _
    $region27: #{tpu_custom_call.1} parent=1 // pred_check_branch
      %156 = sbr.rel (%p32) target = $region29
    $region28: #{tpu_custom_call.1} parent=1 // pred_region
      %v157 = vld [vmem:[#allocation2] sm:$0xff]
      %v158 = vsel %vm153, %v157, 0.0
      %159 = vadd.xlane.f32.xlu0 %v158
      %v160 = vpop.xlane.xlu0 %159
      %v161 = vrot.slane %v160, 4
      %v162 = vadd.f32 %v160, %v161
      %v163 = vrot.slane %v162, 2
      %v164 = vadd.f32 %v162, %v163
      %v165 = vrot.slane %v164, 1
      %v166 = vadd.f32 %v164, %v165
      %s167 = vtos %v166
      %s168 = smul.f32 %s167, 0.015625
      %s169 = scalar_lea.smem [#allocation6], 0
      %170 = sst [smem:[%s169]] %s168
    $region29: #{tpu_custom_call.1} parent=1 // pred_fallthru
      _
    // Predicated region
    $region30: #{tpu_custom_call.1} parent=1 // pred_check
      _
    $region31: #{tpu_custom_call.1} parent=1 // pred_check_branch
      %172 = sbr.rel (0) target = $region33
    $region32: #{tpu_custom_call.1} parent=1 // pred_region
      %s174 = ssub.s32 16, 16
      %175 = vsyncadd [#allocation5], %s174
      %178 = dma.smem_to_hbm [#allocation6], 16, %s4, [#allocation5]
    $region33: #{tpu_custom_call.1} parent=1 // pred_fallthru
      _
    // Predicated region
    $region34: #{tpu_custom_call.1} parent=1 // pred_check
      _
    $region35: #{tpu_custom_call.1} parent=1 // pred_check_branch
      %180 = sbr.rel (0) target = $region37
    $region36: #{tpu_custom_call.1} parent=1 // pred_region
      %181 = dma.done [#allocation5], 16
    $region37: #{tpu_custom_call.1} parent=1 // pred_fallthru
      _
    %182 = sfence
    %183 = vsyncpa [#allocation4], 1
    %184 = vsyncpa [#allocation5], 1

</llo_original>
